<compile_context>
chip_gen: v6e
topology: v6e:2x2x1
jax: 0.10.0
libtpu: 0.0.40
codegen_flags: <defaults>
</compile_context>

<pallas_src>
import jax
import jax.numpy as jnp
from jax.experimental import pallas as pl
from jax.experimental.pallas import tpu as pltpu

_LANE = 128
# ~4 MiB per block: with in + out each double-buffered that is ~16 MiB of
# VMEM, comfortably under the 32 MiB scoped limit (v7x has 64 MiB physical,
# v5e/v6e 128 MiB), while sitting on the ~85% of-HBM-roofline plateau for
# f32 copies.
_TARGET_BLOCK_BYTES = 4 << 20


def _identity_kernel(x_ref, o_ref):
    # Pure pass-through on the current VMEM tile (full-width unmasked stores).
    o_ref[...] = x_ref[...]


def _sublane_multiple(dtype) -> int:
    # f32 -> 8, bf16 -> 16, int8/fp8 -> 32 (sub-32-bit dtypes pack along sublanes).
    itemsize = jnp.dtype(dtype).itemsize
    return max(8, 8 * (4 // max(itemsize, 1)))


def _choose_lane_dense_shape(total: int):
    """Largest multiple of 128 (capped at 8192) that divides the element count."""
    for cols in (8192, 4096, 2048, 1024, 512, 256, 128):
        if total % cols == 0:
            return total // cols, cols
    return None


def _choose_block_rows(rows: int, cols: int, itemsize: int, sublane: int) -> int:
    """Largest divisor of `rows` that is a sublane multiple and fits the block budget."""
    max_rows = max(1, _TARGET_BLOCK_BYTES // (cols * itemsize))
    for d in range(min(rows, max_rows), 0, -1):
        if rows % d == 0 and d % sublane == 0:
            return d
    # Full extent along the row axis is always a legal block dim.
    return rows


def base_net_forward(x: jax.Array) -> jax.Array:
    """Identity forward for the abstract BaseNet, run through a Pallas kernel.

    Works for any dtype/shape; for the NCHW example this flattens 2*4*16*16
    elements into a (1, 2048) lane-dense slab handled as a single block.
    """
    orig_shape = x.shape
    total = int(x.size)
    itemsize = jnp.dtype(x.dtype).itemsize
    sublane = _sublane_multiple(x.dtype)

    lane_dense = _choose_lane_dense_shape(total)
    if lane_dense is not None:
        rows, cols = lane_dense
        block_rows = _choose_block_rows(rows, cols, itemsize, sublane)
    else:
        # TODO(synk): element count not a multiple of 128; fall back to one
        # whole-array block (full-extent dims are always a legal BlockSpec).
        cols = orig_shape[-1] if x.ndim >= 1 else 1
        rows = total // max(cols, 1)
        block_rows = rows

    x2d = x.reshape(rows, cols)
    grid = (rows // block_rows,)

    out2d = pl.pallas_call(
        _identity_kernel,
        out_shape=jax.ShapeDtypeStruct((rows, cols), x2d.dtype),
        grid=grid,
        in_specs=[pl.BlockSpec((block_rows, cols), lambda i: (i, 0))],
        out_specs=pl.BlockSpec((block_rows, cols), lambda i: (i, 0)),
        input_output_aliases={0: 0},
        compiler_params=pltpu.CompilerParams(
            dimension_semantics=("parallel",),
            vmem_limit_bytes=32 << 20,
        ),
    )(x2d)

    return out2d.reshape(orig_shape)


def base_net_summary(params) -> int:
    """Mirror of BaseNet.summary(): count trainable parameters.

    BaseNet itself has none (embedding is None), so this returns 0 for an
    empty param list.
    """
    return int(sum(int(jnp.size(p)) for p in params))


if __name__ == "__main__":
    key = jax.random.PRNGKey(0)
    # Small NCHW input consistent with a conv-style network.
    x = jax.random.normal(key, (2, 4, 16, 16), dtype=jnp.float32)

    y = base_net_forward(x)
    y = jax.block_until_ready(y)

    # Identity forward: output must exactly equal input.
    assert y.shape == x.shape and y.dtype == x.dtype
    assert bool(jnp.all(y == x))

    # BaseNet has no trainable parameters.
    n_params = base_net_summary([])
    assert n_params == 0

    print("KERNEL_OK")
</pallas_src>

<mosaic_0001>
module attributes {stable_mosaic.version = 11 : i64} {
  func.func @_identity_kernel(%arg0: i32, %arg1: memref<1x2048xf32, #tpu.memory_space<vmem>>, %arg2: memref<1x2048xf32, #tpu.memory_space<vmem>>) attributes {dimension_semantics = [#tpu.dimension_semantics<parallel>], iteration_bounds = array<i64: 1>, scalar_prefetch = 0 : i64, scratch_operands = 0 : i64, tpu.core_type = #tpu.core_type<tc>, window_params = [{transform_indices = @transform_0, window_bounds = array<i64: 1, 2048>}, {transform_indices = @transform_1, window_bounds = array<i64: 1, 2048>}]} {
    %c0 = arith.constant 0 : index
    %c0_0 = arith.constant 0 : index
    %0 = vector.load %arg1[%c0, %c0_0] : memref<1x2048xf32, #tpu.memory_space<vmem>>, vector<1x2048xf32>
    %c0_1 = arith.constant 0 : index
    %c0_2 = arith.constant 0 : index
    %1 = vector.load %arg2[%c0_1, %c0_2] : memref<1x2048xf32, #tpu.memory_space<vmem>>, vector<1x2048xf32>
    tpu.vector_store %arg2[%c0_1, %c0_2], %0 {strides = array<i32>} : memref<1x2048xf32, #tpu.memory_space<vmem>>, vector<1x2048xf32>,
    return
  }
  func.func @transform_0(%arg0: i32) -> (i32, i32) {
    %c0_i32 = arith.constant 0 : i32
    %c0_i32_0 = arith.constant 0 : i32
    return %arg0, %c0_i32 : i32, i32
  }
  func.func @transform_1(%arg0: i32) -> (i32, i32) {
    %c0_i32 = arith.constant 0 : i32
    %c0_i32_0 = arith.constant 0 : i32
    return %arg0, %c0_i32 : i32, i32
  }
}

</mosaic_0001>

<llo_original>
// kernel: tpu_custom_call.1
$region0: #{tpu_custom_call.1}
  #allocation0 [shape = 'u32[]', space=smem, size = 0x4, offset = 0x4, fixed_abs, tag = 'smem constant byte address 0x4 - core index']
  #allocation1 [shape = 'u32[144,128]{1,0:T(1,128)}', space=vmem, size = 0x12000, scoped, tag = 'internal scratch']
  %s0 = inlined_call_operand.hbm [shape: f32[1,2048], index: 0, kind: input, shape index: {}, may-alias: {0,1}]
  %s1 = inlined_call_operand.hbm [shape: f32[1,2048], index: 1, kind: output, shape index: {}, may-alias: {0,1}]
  %s2 = sld [smem:[#allocation0]]
  $region18: #{tpu_custom_call.1} parent=0
    _
  %s4 = ssub.s32 1, %s2
  %s5 = scalar_select 0, %s4, %s2
  $region1: #{tpu_custom_call.1} parent=0
    #allocation2 [shape = 'u8[8192]{0}', space=vmem, size = 0x2000, scoped, tag = 'input window, operand 0, single buffered']
    #allocation3 [shape = 's32[1]{0}', space=sflag, size = 0x4, scoped, tag = 'scoped memory for tpu_custom_call.1']
    #allocation4 [shape = 's32[1]{0}', space=sflag, size = 0x4, scoped, tag = 'scoped memory for tpu_custom_call.1']
    #allocation5 [shape = 'u8[8192]{0}', space=vmem, size = 0x2000, scoped, tag = 'output window, operand 0, single buffered']
    %6 = vsyncpa [#allocation3], 0
    %7 = vsyncpa [#allocation4], 0
    // Predicated region
    $region2: #{tpu_custom_call.1} parent=1 // pred_check
      _
    $region3: #{tpu_custom_call.1} parent=1 // pred_check_branch
      %9 = sbr.rel (0) target = $region5
    $region4: #{tpu_custom_call.1} parent=1 // pred_region
      %s11 = ssub.s32 256, 256
      %12 = vsyncadd [#allocation3], %s11
      %s14 = sshll.u32 [#allocation2], 4
      %s15 = int_to_ptr.vmem [resolvable:$true] %s14
      %17 = dma.hbm_to_vmem [thread:$0]  %s0, 256, %s15, [#allocation3]
    $region5: #{tpu_custom_call.1} parent=1 // pred_fallthru
      _
    // Predicated region
    $region6: #{tpu_custom_call.1} parent=1 // pred_check
      _
    $region7: #{tpu_custom_call.1} parent=1 // pred_check_branch
      %19 = sbr.rel (0) target = $region9
    $region8: #{tpu_custom_call.1} parent=1 // pred_region
      %20 = dma.done [#allocation3], 256
    $region9: #{tpu_custom_call.1} parent=1 // pred_fallthru
      _
    %v21 = vld [vmem:[#allocation2] sm:$0xff]
    %v22 = vld [vmem:[#allocation2 + $0x8] sm:$0xff]
    %23 = vst [vmem:[#allocation5] sm:$0xff] %v21
    %24 = vst [vmem:[#allocation5 + $0x8] sm:$0xff] %v22
    // Predicated region
    $region10: #{tpu_custom_call.1} parent=1 // pred_check
      _
    $region11: #{tpu_custom_call.1} parent=1 // pred_check_branch
      %26 = sbr.rel (0) target = $region13
    $region12: #{tpu_custom_call.1} parent=1 // pred_region
      %s28 = ssub.s32 256, 256
      %29 = vsyncadd [#allocation4], %s28
      %s31 = sshll.u32 [#allocation5], 4
      %s32 = int_to_ptr.vmem [resolvable:$true] %s31
      %34 = dma.vmem_to_hbm [thread:$0]  %s32, 256, %s1, [#allocation4]
    $region13: #{tpu_custom_call.1} parent=1 // pred_fallthru
      _
    // Predicated region
    $region14: #{tpu_custom_call.1} parent=1 // pred_check
      _
    $region15: #{tpu_custom_call.1} parent=1 // pred_check_branch
      %36 = sbr.rel (0) target = $region17
    $region16: #{tpu_custom_call.1} parent=1 // pred_region
      %37 = dma.done [#allocation4], 256
    $region17: #{tpu_custom_call.1} parent=1 // pred_fallthru
      _
    %38 = vsyncpa [#allocation3], 1
    %39 = vsyncpa [#allocation4], 1

</llo_original>
